<compile_context>
chip_gen: v7x
topology: tpu7x:2x2x1
jax: 0.10.0
libtpu: 0.0.40
codegen_flags: <defaults>
</compile_context>

<pallas_src>
import functools
import math

import jax
import jax.numpy as jnp
from jax.experimental import pallas as pl
from jax.experimental.pallas import tpu as pltpu


def timesteps_kernel(t_ref, freqs_ref, phase_ref, o_ref):
    """o[b, c] = sin(t[b] * freqs[c] + phase[c])  ==  [cos(t*f) | sin(t*f)].

    t_ref:     [bb, 1]  f32 timesteps tile
    freqs_ref: [1,  nc] f32 constant row  [f_0..f_{h-1} | f_0..f_{h-1}]
    phase_ref: [1,  nc] f32 constant row  [pi/2 ... pi/2 | 0 ... 0]
    o_ref:     [bb, nc] f32 output tile (single lane-dense full-width store)
    """
    t = t_ref[...]                                   # (bb, 1), broadcasts over lanes
    o_ref[...] = jnp.sin(t * freqs_ref[...] + phase_ref[...])


def _round_up(x: int, m: int) -> int:
    return ((x + m - 1) // m) * m


@functools.partial(jax.jit, static_argnames=("num_channels",))
def timesteps_embedding(timesteps, num_channels: int = 320):
    """JAX/Pallas equivalent of the PyTorch `Timesteps` module.

    timesteps: [B] (int or float) -> [B, num_channels] float32, cos|sin order.
    """
    # TODO(synk): odd num_channels (PyTorch would emit 2*(nc//2) cols) not supported.
    assert num_channels % 2 == 0, "num_channels must be even"
    B = timesteps.shape[0]
    half = num_channels // 2

    t2 = timesteps.astype(jnp.float32).reshape(B, 1)

    # Frequency / phase tables: depend only on the static num_channels, so XLA
    # constant-folds them.  Built exactly like the PyTorch reference so the f32
    # frequencies match bit-for-bit.
    exponent = (-math.log(10000.0)) * jnp.arange(half, dtype=jnp.float32) / half
    f = jnp.exp(exponent)                                          # (half,)
    freqs = jnp.concatenate([f, f]).reshape(1, num_channels)       # (1, nc)
    phase = jnp.concatenate([
        jnp.full((half,), math.pi / 2.0, dtype=jnp.float32),       # cos half
        jnp.zeros((half,), dtype=jnp.float32),                     # sin half
    ]).reshape(1, num_channels)                                    # (1, nc)

    # Batch tiling: single full block for small B; for B >= 16, split into at
    # least 2 blocks (rows a multiple of 8) so the "parallel" grid axis can use
    # both TensorCores on v7x.  Ragged last block is masked by Pallas; VMEM is
    # never the constraint at these sizes.
    if B < 16:
        block_b = B
    else:
        block_b = min(1024, _round_up(pl.cdiv(B, 2), 8))
    grid = (pl.cdiv(B, block_b),)

    return pl.pallas_call(
        timesteps_kernel,
        out_shape=jax.ShapeDtypeStruct((B, num_channels), jnp.float32),
        grid=grid,
        in_specs=[
            pl.BlockSpec((block_b, 1), lambda i: (i, 0)),
            pl.BlockSpec((1, num_channels), lambda i: (0, 0)),
            pl.BlockSpec((1, num_channels), lambda i: (0, 0)),
        ],
        out_specs=pl.BlockSpec((block_b, num_channels), lambda i: (i, 0)),
        compiler_params=pltpu.CompilerParams(
            dimension_semantics=("parallel",)),
    )(t2, freqs, phase)


if __name__ == "__main__":
    B = 2
    NUM_CHANNELS = 320  # module default

    key = jax.random.PRNGKey(0)
    # Integer diffusion timesteps in [0, 1000), as a scheduler would produce.
    timesteps = jax.random.randint(key, (B,), 0, 1000).astype(jnp.float32)

    out = jax.block_until_ready(
        timesteps_embedding(timesteps, num_channels=NUM_CHANNELS))

    # Pure-JAX f32 reference mirroring the PyTorch forward exactly.
    half = NUM_CHANNELS // 2
    exponent = (-math.log(10000.0)) * jnp.arange(half, dtype=jnp.float32) / half
    emb = timesteps.astype(jnp.float32)[:, None] * jnp.exp(exponent)[None, :]
    ref = jnp.concatenate([jnp.cos(emb), jnp.sin(emb)], axis=-1)

    assert out.shape == (B, NUM_CHANNELS), out.shape
    assert bool(jnp.all(jnp.isfinite(out)))
    # Tolerance note: arguments reach ~1e3 where one f32 ulp is ~6e-5, so the
    # cos(x) == sin(x + pi/2) rewrite plus any sin-implementation delta between
    # the Pallas kernel and XLA legitimately differs from the f32 reference by
    # up to ~1e-4 absolute; 2.5e-4 keeps comfortable margin without hiding bugs.
    max_err = float(jnp.max(jnp.abs(out - ref)))
    assert max_err < 2.5e-4, max_err
    print("KERNEL_OK")
</pallas_src>

<mosaic_0001>
module attributes {stable_mosaic.version = 11 : i64} {
  func.func @timesteps_kernel(%arg0: i32, %arg1: memref<2x1xf32, #tpu.memory_space<vmem>>, %arg2: memref<1x320xf32, #tpu.memory_space<vmem>>, %arg3: memref<1x320xf32, #tpu.memory_space<vmem>>, %arg4: memref<2x320xf32, #tpu.memory_space<vmem>>) attributes {dimension_semantics = [#tpu.dimension_semantics<parallel>], iteration_bounds = array<i64: 1>, scalar_prefetch = 0 : i64, scratch_operands = 0 : i64, tpu.core_type = #tpu.core_type<tc>, window_params = [{transform_indices = @transform_0, window_bounds = array<i64: 2, 1>}, {pipeline_mode = #tpu.pipeline_mode<synchronous>, transform_indices = @transform_1, window_bounds = array<i64: 1, 320>}, {pipeline_mode = #tpu.pipeline_mode<synchronous>, transform_indices = @transform_2, window_bounds = array<i64: 1, 320>}, {transform_indices = @transform_3, window_bounds = array<i64: 2, 320>}]} {
    %c0 = arith.constant 0 : index
    %c0_0 = arith.constant 0 : index
    %0 = vector.load %arg1[%c0, %c0_0] : memref<2x1xf32, #tpu.memory_space<vmem>>, vector<2x1xf32>
    %c0_1 = arith.constant 0 : index
    %c0_2 = arith.constant 0 : index
    %1 = vector.load %arg2[%c0_1, %c0_2] : memref<1x320xf32, #tpu.memory_space<vmem>>, vector<1x320xf32>
    %2 = vector.broadcast %0 : vector<2x1xf32> to vector<2x320xf32>
    %3 = vector.broadcast %1 : vector<1x320xf32> to vector<2x320xf32>
    %4 = arith.mulf %2, %3 : vector<2x320xf32>
    %c0_3 = arith.constant 0 : index
    %c0_4 = arith.constant 0 : index
    %5 = vector.load %arg3[%c0_3, %c0_4] : memref<1x320xf32, #tpu.memory_space<vmem>>, vector<1x320xf32>
    %6 = vector.broadcast %5 : vector<1x320xf32> to vector<2x320xf32>
    %7 = arith.addf %4, %6 : vector<2x320xf32>
    %8 = math.sin %7 : vector<2x320xf32>
    %c0_5 = arith.constant 0 : index
    %c0_6 = arith.constant 0 : index
    %9 = vector.load %arg4[%c0_5, %c0_6] : memref<2x320xf32, #tpu.memory_space<vmem>>, vector<2x320xf32>
    tpu.vector_store %arg4[%c0_5, %c0_6], %8 {strides = array<i32>} : memref<2x320xf32, #tpu.memory_space<vmem>>, vector<2x320xf32>,
    return
  }
  func.func @transform_0(%arg0: i32) -> (i32, i32) {
    %c0_i32 = arith.constant 0 : i32
    %c0_i32_0 = arith.constant 0 : i32
    return %arg0, %c0_i32 : i32, i32
  }
  func.func @transform_1(%arg0: i32) -> (i32, i32) {
    %c0_i32 = arith.constant 0 : i32
    %c0_i32_0 = arith.constant 0 : i32
    %c0_i32_1 = arith.constant 0 : i32
    return %c0_i32, %c0_i32_0 : i32, i32
  }
  func.func @transform_2(%arg0: i32) -> (i32, i32) {
    %c0_i32 = arith.constant 0 : i32
    %c0_i32_0 = arith.constant 0 : i32
    %c0_i32_1 = arith.constant 0 : i32
    return %c0_i32, %c0_i32_0 : i32, i32
  }
  func.func @transform_3(%arg0: i32) -> (i32, i32) {
    %c0_i32 = arith.constant 0 : i32
    %c0_i32_0 = arith.constant 0 : i32
    return %arg0, %c0_i32 : i32, i32
  }
}

</mosaic_0001>

<llo_original>
// kernel: timesteps_embedding.1
$region0: #{timesteps_embedding.1}
  #allocation0 [shape = 'u32[]', space=smem, size = 0x4, offset = 0x4, fixed_abs, tag = 'smem constant byte address 0x4 - core index']
  #allocation1 [shape = 'u32[144,128]{1,0:T(1,128)}', space=vmem, size = 0x12000, scoped, tag = 'internal scratch']
  %s0 = inlined_call_operand.vmem [shape: f32[2,1], index: 0, kind: input, shape index: {}]
  %s1 = inlined_call_operand.vmem [shape: f32[1,320], index: 1, kind: input, shape index: {}]
  %s2 = inlined_call_operand.vmem [shape: f32[1,320], index: 2, kind: input, shape index: {}]
  %s3 = inlined_call_operand.hbm [shape: f32[2,320], index: 3, kind: output, shape index: {}]
  %s4 = sld [smem:[#allocation0]]
  $region22: #{timesteps_embedding.1} parent=0
    _
  %s6 = ssub.s32 1, %s4
  %s7 = scalar_select 0, %s6, %s4
  $region1: #{timesteps_embedding.1} parent=0
    #allocation2 [shape = 'u8[3072]{0}', space=vmem, size = 0xc00, scoped, tag = 'output window, operand 0, single buffered']
    #allocation3 [shape = 's32[1]{0}', space=sflag, size = 0x4, scoped, tag = 'scoped memory for timesteps_embedding.1']
    %8 = vsyncpa [#allocation3], 0
    // Predicated region
    $region2: #{timesteps_embedding.1} parent=1 // pred_check
      _
    $region3: #{timesteps_embedding.1} parent=1 // pred_check_branch
      %10 = sbr.rel (0) target = $region5
    $region4: #{timesteps_embedding.1} parent=1 // pred_region
      _
    $region5: #{timesteps_embedding.1} parent=1 // pred_fallthru
      _
    // Predicated region
    $region6: #{timesteps_embedding.1} parent=1 // pred_check
      _
    $region7: #{timesteps_embedding.1} parent=1 // pred_check_branch
      %12 = sbr.rel (0) target = $region9
    $region8: #{timesteps_embedding.1} parent=1 // pred_region
      _
    $region9: #{timesteps_embedding.1} parent=1 // pred_fallthru
      _
    // Predicated region
    $region10: #{timesteps_embedding.1} parent=1 // pred_check
      _
    $region11: #{timesteps_embedding.1} parent=1 // pred_check_branch
      %14 = sbr.rel (0) target = $region13
    $region12: #{timesteps_embedding.1} parent=1 // pred_region
      _
    $region13: #{timesteps_embedding.1} parent=1 // pred_fallthru
      _
    %v15 = vld [vmem:[%s0] sm:$0x3]
    %v16 = vld [vmem:[%s1] sm:$0x7]
    %18 = vset.pattern.permute.xlu0 0
    %19 = vperm.xlu0 %18, %v15
    %v20 = vpop.permute.xlu0 %19
    %v23 = vlaneseq
    %v24 = vshrl.u32 %v23, 7
    %v25 = vsub.s32 0, %v24
    %v26 = vrot.slane %v16, %v25
    %v27 = vlaneseq
    %v28 = vshrl.u32 %v27, 7
    %v29 = vsub.s32 1, %v28
    %v30 = vrot.slane %v16, %v29
    %v31 = vlaneseq
    %v32 = vshrl.u32 %v31, 7
    %v33 = vsub.s32 2, %v32
    %v34 = vrot.slane %v16, %v33
    %v38 = vmul.f32 %v20, %v26
    %v39 = vmul.f32 %v20, %v30
    %v40 = vmul.f32 %v20, %v34
    %v41 = vld [vmem:[%s2] sm:$0x7]
    %v43 = vlaneseq
    %v44 = vshrl.u32 %v43, 7
    %v45 = vsub.s32 0, %v44
    %v46 = vrot.slane %v41, %v45
    %v47 = vlaneseq
    %v48 = vshrl.u32 %v47, 7
    %v49 = vsub.s32 1, %v48
    %v50 = vrot.slane %v41, %v49
    %v51 = vlaneseq
    %v52 = vshrl.u32 %v51, 7
    %v53 = vsub.s32 2, %v52
    %v54 = vrot.slane %v41, %v53
    %v58 = vadd.f32 %v38, %v46
    %v59 = vadd.f32 %v39, %v50
    %v60 = vadd.f32 %v40, %v54
    %v61 = vand.u32 2147483647, %v58
    %vm62 = vcmp.le.f32.partialorder %v61, 0.7853982
    %vm63 = vcmp.lt.s32.totalorder %v58, 0
    %v64 = vand.u32 %v58, 2139095040
    %v65 = vshrl.u32 %v64, 23
    %v66 = vsub.s32 %v65, 127
    %v67 = vand.u32 2147483647, %v58
    %v68 = vand.u32 %v67, 8388607
    %v69 = vor.u32 %v68, 8388608
    %v70 = vsub.s32 0, %v69
    %v71 = vadd.s32 %v66, 1
    %vm72 = vcmp.gt.s32.totalorder %v71, 0
    %v73 = vsel %vm72, %v71, 0
    %v74 = vshrl.u32 %v73, 5
    %v75 = vand.u32 %v73, 31
    %v76 = vsub.s32 32, %v75
    %v77 = vshrl.u32 683565275, %v76
    %v78 = vshll.u32 683565275, %v75
    %v79 = vshrl.u32 2475754826, %v76
    %v80 = vor.u32 %v78, %v79
    %v81 = vshll.u32 2475754826, %v75
    %v82 = vshrl.u32 2131351028, %v76
    %v83 = vor.u32 %v81, %v82
    %v84 = vshll.u32 2131351028, %v75
    %v85 = vshrl.u32 2102212464, %v76
    %v86 = vor.u32 %v84, %v85
    %v87 = vshll.u32 2102212464, %v75
    %v88 = vshrl.u32 920167782, %v76
    %v89 = vor.u32 %v87, %v88
    %v90 = vshll.u32 920167782, %v75
    %v91 = vshrl.u32 1326507024, %v76
    %v92 = vor.u32 %v90, %v91
    %vm93 = vcmp.lt.s32.totalorder %v74, 1
    %vm94 = vcmp.lt.s32.totalorder %v74, 2
    %vm95 = vcmp.lt.s32.totalorder %v74, 3
    %vm96 = vcmp.lt.s32.totalorder %v74, 4
    %v97 = vsel %vm93, %v77, %v80
    %v98 = vsel %vm96, %v86, 2102212464
    %v99 = vsel %vm95, %v83, %v98
    %v100 = vsel %vm94, %v97, %v99
    %v101 = vsel %vm93, %v80, %v83
    %v102 = vsel %vm96, %v89, 920167782
    %v103 = vsel %vm95, %v86, %v102
    %v104 = vsel %vm94, %v101, %v103
    %v105 = vsel %vm93, %v83, %v86
    %v106 = vsel %vm96, %v92, 1326507024
    %v107 = vsel %vm95, %v89, %v106
    %v108 = vsel %vm94, %v105, %v107
    %v109 = vshll.u32 %v69, 8
    %v110 = vmul.u32.u64.compose %v109, %v108
    %v111 = vextract.low.u32 %v110
    %v112 = vextract.high.u32 %v110
    %v113 = vmul.u32.u64.compose %v109, %v104
    %v114 = vextract.low.u32 %v113
    %v115 = vextract.high.u32 %v113
    %v116 = vmul.u32 %v109, %v100
    %v117 = vadd.s32 %v112, %v114
    %vm118 = vc.u32 %v112, %v114
    %v119 = vadd.s32 %v115, 1
    %v120 = vsel %vm118, %v119, %v115
    %v121 = vadd.s32 %v116, %v120
    %v122 = vadd.s32 %v121, 536870912
    %v123 = vshrl.u32 %v122, 30
    %v124 = vshll.u32 %v123, 30
    %v125 = vsub.s32 %v121, %v124
    %vm126 = vcmp.lt.s32.totalorder %v125, 0
    %v127 = vsub.s32 0, %v125
    %v128 = vsel %vm126, %v127, %v125
    %v129 = vclz %v128
    %v130 = vsub.s32 %v129, 2
    %vm131 = vcmp.gt.s32.totalorder 0, %v130
    %v132 = vsel %vm131, 0, %v130
    %v133 = vsub.s32 32, %v132
    %v134 = vshll.u32 %v125, %v132
    %v135 = vshrl.u32 %v117, %v133
    %v136 = vor.u32 %v134, %v135
    %v137 = vsub.s32 4294967266, %v132
    %v138 = vadd.s32 %v137, 127
    %v139 = vshll.u32 %v138, 23
    %v140 = vor.u32 4788187, %v139
    %v141 = vand.u32 2147483647, %v140
    %v143 = vcvt.s32.f32 %v136
    %v144 = vmul.f32 %v143, %v141
    %v145 = vxor.u32 %v144, 2147483648
    %v146 = vsel %vm63, %v145, %v144
    %v147 = vsub.s32 4, %v123
    %v148 = vsel %vm63, %v147, %v123
    %v149 = vsel %vm62, %v58, %v146
    %v150 = vsel %vm62, 0, %v148
    %v151 = vcosq.f32.pop %v149
    %v152 = vsinq.f32.pop %v149
    %vm153 = vweird.f32 %v58
    %v154 = vadd.s32 %v150, 3
    %v155 = vand.u32 %v154, 3
    %vm156 = vcmp.lt.s32.totalorder %v155, 2
    %vm157 = vcmp.eq.s32.totalorder %v155, 0
    %v158 = vxor.u32 %v152, 2147483648
    %v159 = vsel %vm157, %v151, %v158
    %vm160 = vcmp.eq.s32.totalorder %v155, 2
    %v161 = vxor.u32 %v151, 2147483648
    %v162 = vsel %vm160, %v161, %v152
    %v163 = vsel %vm156, %v159, %v162
    %v164 = vsel %vm153, nan, %v163
    %v165 = vand.u32 2147483647, %v59
    %vm166 = vcmp.le.f32.partialorder %v165, 0.7853982
    %vm167 = vcmp.lt.s32.totalorder %v59, 0
    %v168 = vand.u32 %v59, 2139095040
    %v169 = vshrl.u32 %v168, 23
    %v170 = vsub.s32 %v169, 127
    %v171 = vand.u32 2147483647, %v59
    %v172 = vand.u32 %v171, 8388607
    %v173 = vor.u32 %v172, 8388608
    %v174 = vsub.s32 0, %v173
    %v175 = vadd.s32 %v170, 1
    %vm176 = vcmp.gt.s32.totalorder %v175, 0
    %v177 = vsel %vm176, %v175, 0
    %v178 = vshrl.u32 %v177, 5
    %v179 = vand.u32 %v177, 31
    %v180 = vsub.s32 32, %v179
    %v181 = vshrl.u32 683565275, %v180
    %v182 = vshll.u32 683565275, %v179
    %v183 = vshrl.u32 2475754826, %v180
    %v184 = vor.u32 %v182, %v183
    %v185 = vshll.u32 2475754826, %v179
    %v186 = vshrl.u32 2131351028, %v180
    %v187 = vor.u32 %v185, %v186
    %v188 = vshll.u32 2131351028, %v179
    %v189 = vshrl.u32 2102212464, %v180
    %v190 = vor.u32 %v188, %v189
    %v191 = vshll.u32 2102212464, %v179
    %v192 = vshrl.u32 920167782, %v180
    %v193 = vor.u32 %v191, %v192
    %v194 = vshll.u32 920167782, %v179
    %v195 = vshrl.u32 1326507024, %v180
    %v196 = vor.u32 %v194, %v195
    %vm197 = vcmp.lt.s32.totalorder %v178, 1
    %vm198 = vcmp.lt.s32.totalorder %v178, 2
    %vm199 = vcmp.lt.s32.totalorder %v178, 3
    %vm200 = vcmp.lt.s32.totalorder %v178, 4
    %v201 = vsel %vm197, %v181, %v184
    %v202 = vsel %vm200, %v190, 2102212464
    %v203 = vsel %vm199, %v187, %v202
    %v204 = vsel %vm198, %v201, %v203
    %v205 = vsel %vm197, %v184, %v187
    %v206 = vsel %vm200, %v193, 920167782
    %v207 = vsel %vm199, %v190, %v206
    %v208 = vsel %vm198, %v205, %v207
    %v209 = vsel %vm197, %v187, %v190
    %v210 = vsel %vm200, %v196, 1326507024
    %v211 = vsel %vm199, %v193, %v210
    %v212 = vsel %vm198, %v209, %v211
    %v213 = vshll.u32 %v173, 8
    %v214 = vmul.u32.u64.compose %v213, %v212
    %v215 = vextract.low.u32 %v214
    %v216 = vextract.high.u32 %v214
    %v217 = vmul.u32.u64.compose %v213, %v208
    %v218 = vextract.low.u32 %v217
    %v219 = vextract.high.u32 %v217
    %v220 = vmul.u32 %v213, %v204
    %v221 = vadd.s32 %v216, %v218
    %vm222 = vc.u32 %v216, %v218
    %v223 = vadd.s32 %v219, 1
    %v224 = vsel %vm222, %v223, %v219
    %v225 = vadd.s32 %v220, %v224
    %v226 = vadd.s32 %v225, 536870912
    %v227 = vshrl.u32 %v226, 30
    %v228 = vshll.u32 %v227, 30
    %v229 = vsub.s32 %v225, %v228
    %vm230 = vcmp.lt.s32.totalorder %v229, 0
    %v231 = vsub.s32 0, %v229
    %v232 = vsel %vm230, %v231, %v229
    %v233 = vclz %v232
    %v234 = vsub.s32 %v233, 2
    %vm235 = vcmp.gt.s32.totalorder 0, %v234
    %v236 = vsel %vm235, 0, %v234
    %v237 = vsub.s32 32, %v236
    %v238 = vshll.u32 %v229, %v236
    %v239 = vshrl.u32 %v221, %v237
    %v240 = vor.u32 %v238, %v239
    %v241 = vsub.s32 4294967266, %v236
    %v242 = vadd.s32 %v241, 127
    %v243 = vshll.u32 %v242, 23
    %v244 = vor.u32 4788187, %v243
    %v245 = vand.u32 2147483647, %v244
    %v247 = vcvt.s32.f32 %v240
    %v248 = vmul.f32 %v247, %v245
    %v249 = vxor.u32 %v248, 2147483648
    %v250 = vsel %vm167, %v249, %v248
    %v251 = vsub.s32 4, %v227
    %v252 = vsel %vm167, %v251, %v227
    %v253 = vsel %vm166, %v59, %v250
    %v254 = vsel %vm166, 0, %v252
    %v255 = vcosq.f32.pop %v253
    %v256 = vsinq.f32.pop %v253
    %vm257 = vweird.f32 %v59
    %v258 = vadd.s32 %v254, 3
    %v259 = vand.u32 %v258, 3
    %vm260 = vcmp.lt.s32.totalorder %v259, 2
    %vm261 = vcmp.eq.s32.totalorder %v259, 0
    %v262 = vxor.u32 %v256, 2147483648
    %v263 = vsel %vm261, %v255, %v262
    %vm264 = vcmp.eq.s32.totalorder %v259, 2
    %v265 = vxor.u32 %v255, 2147483648
    %v266 = vsel %vm264, %v265, %v256
    %v267 = vsel %vm260, %v263, %v266
    %v268 = vsel %vm257, nan, %v267
    %v269 = vand.u32 2147483647, %v60
    %vm270 = vcmp.le.f32.partialorder %v269, 0.7853982
    %vm271 = vcmp.lt.s32.totalorder %v60, 0
    %v272 = vand.u32 %v60, 2139095040
    %v273 = vshrl.u32 %v272, 23
    %v274 = vsub.s32 %v273, 127
    %v275 = vand.u32 2147483647, %v60
    %v276 = vand.u32 %v275, 8388607
    %v277 = vor.u32 %v276, 8388608
    %v278 = vsub.s32 0, %v277
    %v279 = vadd.s32 %v274, 1
    %vm280 = vcmp.gt.s32.totalorder %v279, 0
    %v281 = vsel %vm280, %v279, 0
    %v282 = vshrl.u32 %v281, 5
    %v283 = vand.u32 %v281, 31
    %v284 = vsub.s32 32, %v283
    %v285 = vshrl.u32 683565275, %v284
    %v286 = vshll.u32 683565275, %v283
    %v287 = vshrl.u32 2475754826, %v284
    %v288 = vor.u32 %v286, %v287
    %v289 = vshll.u32 2475754826, %v283
    %v290 = vshrl.u32 2131351028, %v284
    %v291 = vor.u32 %v289, %v290
    %v292 = vshll.u32 2131351028, %v283
    %v293 = vshrl.u32 2102212464, %v284
    %v294 = vor.u32 %v292, %v293
    %v295 = vshll.u32 2102212464, %v283
    %v296 = vshrl.u32 920167782, %v284
    %v297 = vor.u32 %v295, %v296
    %v298 = vshll.u32 920167782, %v283
    %v299 = vshrl.u32 1326507024, %v284
    %v300 = vor.u32 %v298, %v299
    %vm301 = vcmp.lt.s32.totalorder %v282, 1
    %vm302 = vcmp.lt.s32.totalorder %v282, 2
    %vm303 = vcmp.lt.s32.totalorder %v282, 3
    %vm304 = vcmp.lt.s32.totalorder %v282, 4
    %v305 = vsel %vm301, %v285, %v288
    %v306 = vsel %vm304, %v294, 2102212464
    %v307 = vsel %vm303, %v291, %v306
    %v308 = vsel %vm302, %v305, %v307
    %v309 = vsel %vm301, %v288, %v291
    %v310 = vsel %vm304, %v297, 920167782
    %v311 = vsel %vm303, %v294, %v310
    %v312 = vsel %vm302, %v309, %v311
    %v313 = vsel %vm301, %v291, %v294
    %v314 = vsel %vm304, %v300, 1326507024
    %v315 = vsel %vm303, %v297, %v314
    %v316 = vsel %vm302, %v313, %v315
    %v317 = vshll.u32 %v277, 8
    %v318 = vmul.u32.u64.compose %v317, %v316
    %v319 = vextract.low.u32 %v318
    %v320 = vextract.high.u32 %v318
    %v321 = vmul.u32.u64.compose %v317, %v312
    %v322 = vextract.low.u32 %v321
    %v323 = vextract.high.u32 %v321
    %v324 = vmul.u32 %v317, %v308
    %v325 = vadd.s32 %v320, %v322
    %vm326 = vc.u32 %v320, %v322
    %v327 = vadd.s32 %v323, 1
    %v328 = vsel %vm326, %v327, %v323
    %v329 = vadd.s32 %v324, %v328
    %v330 = vadd.s32 %v329, 536870912
    %v331 = vshrl.u32 %v330, 30
    %v332 = vshll.u32 %v331, 30
    %v333 = vsub.s32 %v329, %v332
    %vm334 = vcmp.lt.s32.totalorder %v333, 0
    %v335 = vsub.s32 0, %v333
    %v336 = vsel %vm334, %v335, %v333
    %v337 = vclz %v336
    %v338 = vsub.s32 %v337, 2
    %vm339 = vcmp.gt.s32.totalorder 0, %v338
    %v340 = vsel %vm339, 0, %v338
    %v341 = vsub.s32 32, %v340
    %v342 = vshll.u32 %v333, %v340
    %v343 = vshrl.u32 %v325, %v341
    %v344 = vor.u32 %v342, %v343
    %v345 = vsub.s32 4294967266, %v340
    %v346 = vadd.s32 %v345, 127
    %v347 = vshll.u32 %v346, 23
    %v348 = vor.u32 4788187, %v347
    %v349 = vand.u32 2147483647, %v348
    %v351 = vcvt.s32.f32 %v344
    %v352 = vmul.f32 %v351, %v349
    %v353 = vxor.u32 %v352, 2147483648
    %v354 = vsel %vm271, %v353, %v352
    %v355 = vsub.s32 4, %v331
    %v356 = vsel %vm271, %v355, %v331
    %v357 = vsel %vm270, %v60, %v354
    %v358 = vsel %vm270, 0, %v356
    %v359 = vcosq.f32.pop %v357
    %v360 = vsinq.f32.pop %v357
    %vm361 = vweird.f32 %v60
    %v362 = vadd.s32 %v358, 3
    %v363 = vand.u32 %v362, 3
    %vm364 = vcmp.lt.s32.totalorder %v363, 2
    %vm365 = vcmp.eq.s32.totalorder %v363, 0
    %v366 = vxor.u32 %v360, 2147483648
    %v367 = vsel %vm365, %v359, %v366
    %vm368 = vcmp.eq.s32.totalorder %v363, 2
    %v369 = vxor.u32 %v359, 2147483648
    %v370 = vsel %vm368, %v369, %v360
    %v371 = vsel %vm364, %v367, %v370
    %v372 = vsel %vm361, nan, %v371
    %v376 = vcombine.low %v164, %v268
    %v378 = vunpack.c.l.s4 1983009808
    %v379 = vunpack.c.0.s8 %v378
    %v380 = vlaneseq
    %v381 = vshrl.u32 %v380, 7
    %v382 = vsub.s32 %v379, %v381
    %v383 = vrot.slane %v376, %v382
    %v385 = vunpack.c.l.s4 1983009808
    %v386 = vunpack.c.0.s8 %v385
    %v387 = vlaneseq
    %v388 = vshrl.u32 %v387, 7
    %v389 = vsub.s32 %v386, %v388
    %v390 = vrot.slane %v372, %v389
    %v391 = vcombine.low %v383, %v390
    %vm393 = vcmask 1041408
    %vm394 = vcmask 1043458
    %vm395 = vmor %vm394, %vm393
    %vm396 = vcmask 521220
    %vm397 = vmor %vm396, %vm395
    %398 = vst.msk [vmem:[#allocation2] sm:$0x3f] %vm397, %v391
    // Predicated region
    $region14: #{timesteps_embedding.1} parent=1 // pred_check
      _
    $region15: #{timesteps_embedding.1} parent=1 // pred_check_branch
      %400 = sbr.rel (0) target = $region17
    $region16: #{timesteps_embedding.1} parent=1 // pred_region
      %s402 = ssub.s32 96, 96
      %403 = vsyncadd [#allocation3], %s402
      %s405 = sshll.u32 [#allocation2], 4
      %s406 = int_to_ptr.vmem [resolvable:$true] %s405
      %408 = dma.vmem_to_hbm [thread:$0]  %s406, 96, %s3, [#allocation3]
    $region17: #{timesteps_embedding.1} parent=1 // pred_fallthru
      _
    // Predicated region
    $region18: #{timesteps_embedding.1} parent=1 // pred_check
      _
    $region19: #{timesteps_embedding.1} parent=1 // pred_check_branch
      %410 = sbr.rel (0) target = $region21
    $region20: #{timesteps_embedding.1} parent=1 // pred_region
      %411 = dma.done [#allocation3], 96
    $region21: #{timesteps_embedding.1} parent=1 // pred_fallthru
      _
    %412 = vsyncpa [#allocation3], 1

</llo_original>
